<compile_context>
chip_gen: v5e
topology: v5e:2x2
jax: 0.10.0
libtpu: 0.0.40
codegen_flags: <defaults>
</compile_context>

<pallas_src>
import functools

import jax
import jax.numpy as jnp
from jax.experimental import pallas as pl
from jax.experimental.pallas import tpu as pltpu


def _round_up(x, m):
    return (x + m - 1) // m * m


def _matmul_bias_kernel(p_ref, w_ref, b_ref, o_ref):
    """o = p @ w + b.

    p_ref: (TM, K)     bf16 patch-matrix tile (im2col rows)
    w_ref: (K, Cout)   bf16 flattened weight, constant index_map -> VMEM resident
    b_ref: (1, Cout)   f32 bias, constant index_map -> VMEM resident
    o_ref: (TM, Cout)  f32 output tile (full Cout dim -> no padded lanes written)
    """
    acc = jnp.dot(p_ref[...], w_ref[...], preferred_element_type=jnp.float32)
    o_ref[...] = (acc + b_ref[...]).astype(o_ref.dtype)


def _im2col_nchw(x, kh, kw, stride):
    """Patch matrix (N*OH*OW, KH*KW*Cin) from an NCHW input.

    Column order is (kh, kw, cin), matching w_oihw.transpose(2,3,1,0).reshape(K, Cout).
    Runs as fused XLA glue in the wrapper (tiny at these shapes); stride is
    absorbed by the strided slices so no oversized tile ever reaches VMEM.
    """
    n, cin, h, w = x.shape
    oh = (h - kh) // stride + 1
    ow = (w - kw) // stride + 1
    if oh <= 0 or ow <= 0:
        raise ValueError("kernel_size larger than input spatial dims")
    taps = []
    for i in range(kh):
        for j in range(kw):
            taps.append(jax.lax.slice(
                x, (0, 0, i, j),
                (n, cin, i + (oh - 1) * stride + 1, j + (ow - 1) * stride + 1),
                (1, 1, stride, stride)))                  # (N, Cin, OH, OW)
    p = jnp.stack(taps, axis=0)                           # (T, N, Cin, OH, OW)
    p = jnp.transpose(p, (1, 3, 4, 0, 2))                 # (N, OH, OW, T, Cin)
    return p.reshape(n * oh * ow, kh * kw * cin), oh, ow


@functools.partial(jax.jit, static_argnames=("stride",))
def conv2d_pallas(x_nchw, w_oihw, bias, *, stride):
    """PyTorch-layout Conv2d (VALID padding): NCHW / OIHW in, NCHW out."""
    n = x_nchw.shape[0]
    cout, cin, kh, kw = w_oihw.shape
    k = kh * kw * cin

    patches, oh, ow = _im2col_nchw(x_nchw, kh, kw, stride)
    m = n * oh * ow

    # M tiling: at least 2 grid steps (feeds both v7x TensorCores), tile rows a
    # multiple of 8, rows per step capped (~512) so VMEM stays tiny everywhere.
    n_steps = max(2, pl.cdiv(m, 512))
    m_tile = _round_up(pl.cdiv(m, n_steps), 8)
    m_pad = m_tile * n_steps

    # MXU operands in bf16 (accumulate + bias add stay f32); done once in XLA.
    patches = jnp.pad(patches, ((0, m_pad - m), (0, 0))).astype(jnp.bfloat16)
    w2d = jnp.transpose(w_oihw, (2, 3, 1, 0)).reshape(k, cout).astype(jnp.bfloat16)
    b2d = bias.reshape(1, cout).astype(jnp.float32)

    # Real work only (no padded-Cout inflation).
    flops = 2 * m * k * cout
    bytes_accessed = (patches.size * 2 + w2d.size * 2 + b2d.size * 4
                      + m_pad * cout * 4)

    out2d = pl.pallas_call(
        _matmul_bias_kernel,
        out_shape=jax.ShapeDtypeStruct((m_pad, cout), jnp.float32),
        grid=(n_steps,),
        in_specs=[
            pl.BlockSpec((m_tile, k), lambda i: (i, 0)),
            pl.BlockSpec((k, cout), lambda i: (0, 0)),    # VMEM resident
            pl.BlockSpec((1, cout), lambda i: (0, 0)),    # VMEM resident
        ],
        out_specs=pl.BlockSpec((m_tile, cout), lambda i: (i, 0)),
        compiler_params=pltpu.CompilerParams(
            dimension_semantics=("parallel",)),
        cost_estimate=pl.CostEstimate(
            flops=flops, transcendentals=0, bytes_accessed=bytes_accessed),
    )(patches, w2d, b2d)

    # TODO(synk): NHWC-native callers can consume the (M, Cout) slab / NHWC
    # reshape directly and skip this final (tiny) transpose back to NCHW, which
    # is kept only to match the PyTorch interface.
    out_nhwc = out2d[:m].reshape(n, oh, ow, cout)
    return jnp.transpose(out_nhwc, (0, 3, 1, 2))


class BaseModel:
    def __init__(self, config):
        self.config = config

    def single_block(self, input_channel, output_channel, kernel_size, stride):
        """Returns a callable equivalent to nn.Sequential(nn.Conv2d(...))."""
        key = jax.random.PRNGKey(0)
        kw_, kb_ = jax.random.split(key)
        fan_in = input_channel * kernel_size * kernel_size
        bound = 1.0 / (fan_in ** 0.5)   # PyTorch Conv2d default init range
        weight = jax.random.uniform(
            kw_, (output_channel, input_channel, kernel_size, kernel_size),
            minval=-bound, maxval=bound, dtype=jnp.float32)
        bias = jax.random.uniform(
            kb_, (output_channel,), minval=-bound, maxval=bound,
            dtype=jnp.float32)

        def block(x):
            return conv2d_pallas(x, weight, bias, stride=stride)

        block.weight = weight
        block.bias = bias
        return block

    def forward(self, x):
        # TODO(synk): reference forward() is `pass` (returns None); kept as-is.
        pass


if __name__ == "__main__":
    model = BaseModel(config={})

    # Small shapes consistent with a Conv2d block.
    N, Cin, H, W = 2, 4, 16, 16
    Cout, Ksz, stride = 8, 3, 1

    x = jax.random.normal(jax.random.PRNGKey(0), (N, Cin, H, W), jnp.float32)

    # forward() matches the reference exactly (no-op).
    assert model.forward(x) is None

    # Run the Pallas conv kernel defined by single_block once.
    block = model.single_block(Cin, Cout, Ksz, stride)
    out = jax.block_until_ready(block(x))

    # Silent correctness check: XLA conv with the same bf16-rounded MXU
    # operands (accumulation in f32), so only summation-order noise remains.
    ref = jax.lax.conv_general_dilated(
        x.astype(jnp.bfloat16).astype(jnp.float32),
        block.weight.astype(jnp.bfloat16).astype(jnp.float32),
        window_strides=(stride, stride), padding="VALID",
        dimension_numbers=("NCHW", "OIHW", "NCHW"),
    ) + block.bias.reshape(1, Cout, 1, 1)
    OH = (H - Ksz) // stride + 1
    OW = (W - Ksz) // stride + 1
    assert out.shape == (N, Cout, OH, OW)
    assert jnp.allclose(out, ref, atol=2e-2, rtol=2e-2)

    print("KERNEL_OK")
</pallas_src>

<mosaic_0001>
module attributes {stable_mosaic.version = 11 : i64} {
  func.func @_matmul_bias_kernel(%arg0: i32, %arg1: memref<200x36xbf16, #tpu.memory_space<vmem>>, %arg2: memref<36x8xbf16, #tpu.memory_space<vmem>>, %arg3: memref<1x8xf32, #tpu.memory_space<vmem>>, %arg4: memref<200x8xf32, #tpu.memory_space<vmem>>) attributes {dimension_semantics = [#tpu.dimension_semantics<parallel>], iteration_bounds = array<i64: 2>, scalar_prefetch = 0 : i64, scratch_operands = 0 : i64, tpu.core_type = #tpu.core_type<tc>, window_params = [{transform_indices = @transform_0, window_bounds = array<i64: 200, 36>}, {pipeline_mode = #tpu.pipeline_mode<synchronous>, transform_indices = @transform_1, window_bounds = array<i64: 36, 8>}, {pipeline_mode = #tpu.pipeline_mode<synchronous>, transform_indices = @transform_2, window_bounds = array<i64: 1, 8>}, {transform_indices = @transform_3, window_bounds = array<i64: 200, 8>}]} {
    %c0 = arith.constant 0 : index
    %c0_0 = arith.constant 0 : index
    %0 = vector.load %arg1[%c0, %c0_0] : memref<200x36xbf16, #tpu.memory_space<vmem>>, vector<200x36xbf16>
    %c0_1 = arith.constant 0 : index
    %c0_2 = arith.constant 0 : index
    %1 = vector.load %arg2[%c0_1, %c0_2] : memref<36x8xbf16, #tpu.memory_space<vmem>>, vector<36x8xbf16>
    %cst = arith.constant dense<0.000000e+00> : vector<200x8xf32>
    %2 = tpu.matmul %0, %1, %cst {dimension_numbers = #tpu.dot_dimension_numbers<[1], [0], [0], [1], [0, 0, 1, 1], [], []>} : vector<200x36xbf16>, vector<36x8xbf16>, vector<200x8xf32> -> vector<200x8xf32>
    %c0_3 = arith.constant 0 : index
    %c0_4 = arith.constant 0 : index
    %3 = vector.load %arg3[%c0_3, %c0_4] : memref<1x8xf32, #tpu.memory_space<vmem>>, vector<1x8xf32>
    %4 = vector.broadcast %3 : vector<1x8xf32> to vector<200x8xf32>
    %5 = arith.addf %2, %4 : vector<200x8xf32>
    %c0_5 = arith.constant 0 : index
    %c0_6 = arith.constant 0 : index
    %6 = vector.load %arg4[%c0_5, %c0_6] : memref<200x8xf32, #tpu.memory_space<vmem>>, vector<200x8xf32>
    tpu.vector_store %arg4[%c0_5, %c0_6], %5 {strides = array<i32>} : memref<200x8xf32, #tpu.memory_space<vmem>>, vector<200x8xf32>,
    return
  }
  func.func @transform_0(%arg0: i32) -> (i32, i32) {
    %c0_i32 = arith.constant 0 : i32
    %c0_i32_0 = arith.constant 0 : i32
    return %arg0, %c0_i32 : i32, i32
  }
  func.func @transform_1(%arg0: i32) -> (i32, i32) {
    %c0_i32 = arith.constant 0 : i32
    %c0_i32_0 = arith.constant 0 : i32
    %c0_i32_1 = arith.constant 0 : i32
    return %c0_i32, %c0_i32_0 : i32, i32
  }
  func.func @transform_2(%arg0: i32) -> (i32, i32) {
    %c0_i32 = arith.constant 0 : i32
    %c0_i32_0 = arith.constant 0 : i32
    %c0_i32_1 = arith.constant 0 : i32
    return %c0_i32, %c0_i32_0 : i32, i32
  }
  func.func @transform_3(%arg0: i32) -> (i32, i32) {
    %c0_i32 = arith.constant 0 : i32
    %c0_i32_0 = arith.constant 0 : i32
    return %arg0, %c0_i32 : i32, i32
  }
}

</mosaic_0001>

<llo_original>
// kernel: conv2d_pallas.1
$region0: #{conv2d_pallas.1}
  #allocation0 [shape = 'u32[]', space=smem, size = 0x4, offset = 0x4, fixed_abs, tag = 'smem constant byte address 0x4 - core index']
  #allocation1 [shape = 'u32[72,128]{1,0:T(1,128)}', space=vmem, size = 0x9000, scoped, tag = 'internal scratch']
  %s0 = inlined_call_operand.vmem [shape: bf16[400,36], index: 0, kind: input, shape index: {}]
  %s1 = inlined_call_operand.vmem [shape: bf16[36,8], index: 1, kind: input, shape index: {}]
  %s2 = inlined_call_operand.vmem [shape: f32[1,8], index: 2, kind: input, shape index: {}]
  %s3 = inlined_call_operand.vmem [shape: f32[400,8], index: 3, kind: output, shape index: {}]
  %s4 = sld [smem:[#allocation0]]
  $region45: #{conv2d_pallas.1} parent=0
    _
  %s6 = ssub.s32 1, %s4
  %s7 = scalar_select 0, %s6, %s4
  loop: start=0, step=1, limit=4
  $region2: #{conv2d_pallas.1} parent=0 // loop_pre_header
    _
  $region3: #{conv2d_pallas.1} parent=0 // loop_header
    %s9 = sphi 0, %s13
    %p10 = scmp.ge.s32.totalorder %s9, 4
    %s19 = sphi 0, %s21
    %s22 = sphi 0, %s19
    %s23 = sphi 0, %s22
    %s39 = sphi 0, %s23
    %s43 = sphi 0, %s43
    %s45 = sphi 0, %s43
    %s46 = sphi 0, %s45
    %s60 = sphi 0, %s46
    %s64 = sphi 0, %s64
    %s66 = sphi 0, %s64
    %s67 = sphi 0, %s66
    %s81 = sphi 0, %s67
    %s87 = sphi 0, %s89
    %s90 = sphi 0, %s87
    %s91 = sphi 0, %s90
    %s107 = sphi 0, %s91
  $region4: #{conv2d_pallas.1} parent=0 // loop_header_branch
    %12 = sbr.rel (%p10) target = $region8
  $region5: #{conv2d_pallas.1} parent=0 // loop_body
    %s14 = ssub.s32 %s9, 1
    %s15 = ssub.s32 %s9, 2
    %s16 = sadd.s32 %s9, 1
    %s17 = ssub.s32 %s9, %s16
    %p18 = scmp.eq.s32.totalorder %s17, 0
    %s20 = sadd.s32 %s19, 1
    %s21 = scalar_select %p18, %s19, %s20
    %p24 = pneg %p18
    %p25 = scmp.eq.s32.totalorder %s9, 1
    %p26 = por %p24, %p25
    %p27 = scmp.ne.s32.totalorder %s19, %s22
    %p28 = scmp.eq.s32.totalorder %s9, 0
    %p29 = por %p27, %p28
    %p30 = scmp.ne.s32.totalorder %s19, %s22
    %p31 = scmp.eq.s32.totalorder %s14, 1
    %p32 = por %p30, %p31
    %p33 = scmp.ne.s32.totalorder %s22, %s23
    %p34 = scmp.eq.s32.totalorder %s14, 0
    %p35 = por %p33, %p34
    %p36 = scmp.ne.s32.totalorder %s22, %s23
    %p37 = scmp.eq.s32.totalorder %s15, 1
    %p38 = por %p36, %p37
    %p40 = scmp.ne.s32.totalorder %s23, %s39
    %p41 = scmp.eq.s32.totalorder %s15, 0
    %p42 = por %p40, %p41
    %s44 = sadd.s32 %s43, 1
    %p47 = scmp.eq.s32.totalorder %s9, 1
    %p48 = scmp.ne.s32.totalorder %s43, %s45
    %p49 = scmp.eq.s32.totalorder %s9, 0
    %p50 = por %p48, %p49
    %p51 = scmp.ne.s32.totalorder %s43, %s45
    %p52 = scmp.eq.s32.totalorder %s14, 1
    %p53 = por %p51, %p52
    %p54 = scmp.ne.s32.totalorder %s45, %s46
    %p55 = scmp.eq.s32.totalorder %s14, 0
    %p56 = por %p54, %p55
    %p57 = scmp.ne.s32.totalorder %s45, %s46
    %p58 = scmp.eq.s32.totalorder %s15, 1
    %p59 = por %p57, %p58
    %p61 = scmp.ne.s32.totalorder %s46, %s60
    %p62 = scmp.eq.s32.totalorder %s15, 0
    %p63 = por %p61, %p62
    %s65 = sadd.s32 %s64, 1
    %p68 = scmp.eq.s32.totalorder %s9, 1
    %p69 = scmp.ne.s32.totalorder %s64, %s66
    %p70 = scmp.eq.s32.totalorder %s9, 0
    %p71 = por %p69, %p70
    %p72 = scmp.ne.s32.totalorder %s64, %s66
    %p73 = scmp.eq.s32.totalorder %s14, 1
    %p74 = por %p72, %p73
    %p75 = scmp.ne.s32.totalorder %s66, %s67
    %p76 = scmp.eq.s32.totalorder %s14, 0
    %p77 = por %p75, %p76
    %p78 = scmp.ne.s32.totalorder %s66, %s67
    %p79 = scmp.eq.s32.totalorder %s15, 1
    %p80 = por %p78, %p79
    %p82 = scmp.ne.s32.totalorder %s67, %s81
    %p83 = scmp.eq.s32.totalorder %s15, 0
    %p84 = por %p82, %p83
    %s85 = ssub.s32 %s9, %s16
    %p86 = scmp.eq.s32.totalorder %s85, 0
    %s88 = sadd.s32 %s87, 1
    %s89 = scalar_select %p86, %s87, %s88
    %p92 = pneg %p86
    %p93 = scmp.eq.s32.totalorder %s9, 1
    %p94 = por %p92, %p93
    %p95 = scmp.ne.s32.totalorder %s87, %s90
    %p96 = scmp.eq.s32.totalorder %s9, 0
    %p97 = por %p95, %p96
    %p98 = scmp.ne.s32.totalorder %s87, %s90
    %p99 = scmp.eq.s32.totalorder %s14, 1
    %p100 = por %p98, %p99
    %p101 = scmp.ne.s32.totalorder %s90, %s91
    %p102 = scmp.eq.s32.totalorder %s14, 0
    %p103 = por %p101, %p102
    %p104 = scmp.ne.s32.totalorder %s90, %s91
    %p105 = scmp.eq.s32.totalorder %s15, 1
    %p106 = por %p104, %p105
    %p108 = scmp.ne.s32.totalorder %s91, %s107
    %p109 = scmp.eq.s32.totalorder %s15, 0
    %p110 = por %p108, %p109
    %p111 = scmp.le.s32.totalorder 1, %s9
    %p112 = scmp.lt.s32.totalorder %s9, 3
    %p113 = pnand %p111, %p112
    %p114 = pneg %p113
    // Predicated region
    $region9: #{conv2d_pallas.1} parent=5 // pred_check
      _
    $region10: #{conv2d_pallas.1} parent=5 // pred_check_branch
      %116 = sbr.rel (%p113) target = $region12
    $region11: #{conv2d_pallas.1} parent=5 // pred_region
      %s117 = ssub.s32 %s9, 1
      // Predicated region
      $region13: #{conv2d_pallas.1} parent=11 // pred_check
        %p118 = pneg %p56
      $region14: #{conv2d_pallas.1} parent=11 // pred_check_branch
        %120 = sbr.rel (%p118) target = $region16
      $region15: #{conv2d_pallas.1} parent=11 // pred_region
        _
      $region16: #{conv2d_pallas.1} parent=11 // pred_fallthru
        _
      // Predicated region
      $region17: #{conv2d_pallas.1} parent=11 // pred_check
        %p121 = pneg %p77
      $region18: #{conv2d_pallas.1} parent=11 // pred_check_branch
        %123 = sbr.rel (%p121) target = $region20
      $region19: #{conv2d_pallas.1} parent=11 // pred_region
        _
      $region20: #{conv2d_pallas.1} parent=11 // pred_fallthru
        _
    $region12: #{conv2d_pallas.1} parent=5 // pred_fallthru
      _
    %p124 = scmp.lt.s32.totalorder %s9, 2
    // Predicated region
    $region21: #{conv2d_pallas.1} parent=5 // pred_check
      %p125 = pneg %p124
    $region22: #{conv2d_pallas.1} parent=5 // pred_check_branch
      %127 = sbr.rel (%p125) target = $region24
    $region23: #{conv2d_pallas.1} parent=5 // pred_region
      // Predicated region
      $region25: #{conv2d_pallas.1} parent=23 // pred_check
        %p128 = pneg %p29
      $region26: #{conv2d_pallas.1} parent=23 // pred_check_branch
        %130 = sbr.rel (%p128) target = $region28
      $region27: #{conv2d_pallas.1} parent=23 // pred_region
        %s131 = smul.u32 25, %s9
        %p132 = scmp.lt.s32.totalorder %s131, 49
        %s133 = scalar_select %p132, %s131, 49
        %s134 = smul.addr %s133, 4
        %s135 = scalar_lea.vmem %s0, %s134
        %s136 = smul.u32 25, %s9
      $region28: #{conv2d_pallas.1} parent=23 // pred_fallthru
        _
    $region24: #{conv2d_pallas.1} parent=5 // pred_fallthru
      _
    %p137 = scmp.le.s32.totalorder 1, %s9
    %p138 = scmp.lt.s32.totalorder %s9, 3
    %p139 = pnand %p137, %p138
    %p140 = pneg %p139
    // Predicated region
    $region29: #{conv2d_pallas.1} parent=5 // pred_check
      _
    $region30: #{conv2d_pallas.1} parent=5 // pred_check_branch
      %142 = sbr.rel (%p139) target = $region32
    $region31: #{conv2d_pallas.1} parent=5 // pred_region
      %s143 = ssub.s32 %s9, 1
      %s144 = smul.u32 25, %s14
      %p145 = scmp.lt.s32.totalorder %s144, 49
      %s146 = scalar_select %p145, %s144, 49
      %s147 = smul.addr %s146, 4
      %s148 = scalar_lea.vmem %s0, %s147
      %p149 = pneg %p35
      %p150 = pneg %p32
      %p151 = pneg %p56
      %p152 = pneg %p53
      %p153 = pneg %p77
      %p154 = pneg %p74
      %p155 = pneg %p103
      %p156 = pneg %p100
      %s157 = smul.u32 25, %s14
      %p158 = scmp.lt.s32.totalorder %s157, 49
      %s159 = scalar_select %p158, %s157, 49
      %s160 = smul.addr %s159, 8
      %s161 = scalar_lea.vmem %s3, %s160
      %s162 = smul.u32 25, %s14
      %p163 = scmp.lt.s32.totalorder %s162, 49
      %s164 = scalar_select %p163, %s162, 49
      %s165 = smul.addr %s164, 4
      %s166 = scalar_lea.vmem %s0, %s165
      %s167 = smul.u32 25, %s14
      %s168 = smul.u32 25, %s14
      %p169 = scmp.lt.s32.totalorder %s168, 49
      %s170 = scalar_select %p169, %s168, 49
      %s171 = smul.addr %s170, 8
      %s172 = scalar_lea.vmem %s3, %s171
      %s173 = smul.u32 25, %s14
      %v175 = vld [vmem:[%s166] sm:$0xf]
      %v176 = vld [vmem:[%s166 + $0x4] sm:$0xf]
      %v177 = vld [vmem:[%s166 + $0x8] sm:$0xf]
      %v178 = vld [vmem:[%s166 + $0xc] sm:$0xf]
      %v179 = vld [vmem:[%s166 + $0x10] sm:$0xf]
      %v180 = vld [vmem:[%s166 + $0x14] sm:$0xf]
      %v181 = vld [vmem:[%s166 + $0x18] sm:$0xf]
      %v182 = vld [vmem:[%s166 + $0x1c] sm:$0xf]
      %v183 = vld [vmem:[%s166 + $0x20] sm:$0xf]
      %v184 = vld [vmem:[%s166 + $0x24] sm:$0xf]
      %v185 = vld [vmem:[%s166 + $0x28] sm:$0xf]
      %v186 = vld [vmem:[%s166 + $0x2c] sm:$0xf]
      %v187 = vld [vmem:[%s166 + $0x30] sm:$0xf]
      %v188 = vld [vmem:[%s166 + $0x34] sm:$0xf]
      %v189 = vld [vmem:[%s166 + $0x38] sm:$0xf]
      %v190 = vld [vmem:[%s166 + $0x3c] sm:$0xf]
      %v191 = vld [vmem:[%s166 + $0x40] sm:$0xf]
      %v192 = vld [vmem:[%s166 + $0x44] sm:$0xf]
      %v193 = vld [vmem:[%s166 + $0x48] sm:$0xf]
      %v194 = vld [vmem:[%s166 + $0x4c] sm:$0xf]
      %v195 = vld [vmem:[%s166 + $0x50] sm:$0xf]
      %v196 = vld [vmem:[%s166 + $0x54] sm:$0xf]
      %v197 = vld [vmem:[%s166 + $0x58] sm:$0xf]
      %v198 = vld [vmem:[%s166 + $0x5c] sm:$0xf]
      %v199 = vld [vmem:[%s166 + $0x60] sm:$0xf]
      %v200 = vld [vmem:[%s1] sm:$0xf]
      %v201 = vld [vmem:[%s1 + $0x4] sm:$0xf]
      %v202 = vld [vmem:[%s1 + $0x8] sm:$0xf]
      %v203 = vld [vmem:[%s1 + $0xc] sm:$0xf]
      %v204 = vld [vmem:[%s1 + $0x10] sm:$0x3]
      %v205 = vld [vmem:[%s2] sm:$0x1]
      %v207 = vperm.slane %v205, 0
      %v234 = vunpack.c.l.b16 %v175
      %v235 = vunpack.c.l.b16 %v176
      %v236 = vunpack.c.l.b16 %v177
      %v237 = vunpack.c.l.b16 %v178
      %v238 = vunpack.c.l.b16 %v179
      %v239 = vunpack.c.l.b16 %v180
      %v240 = vunpack.c.l.b16 %v181
      %v241 = vunpack.c.l.b16 %v182
      %v242 = vunpack.c.l.b16 %v183
      %v243 = vunpack.c.l.b16 %v184
      %v244 = vunpack.c.l.b16 %v185
      %v245 = vunpack.c.l.b16 %v186
      %v246 = vunpack.c.l.b16 %v187
      %v247 = vunpack.c.l.b16 %v188
      %v248 = vunpack.c.l.b16 %v189
      %v249 = vunpack.c.l.b16 %v190
      %v250 = vunpack.c.l.b16 %v191
      %v251 = vunpack.c.l.b16 %v192
      %v252 = vunpack.c.l.b16 %v193
      %v253 = vunpack.c.l.b16 %v194
      %v254 = vunpack.c.l.b16 %v195
      %v255 = vunpack.c.l.b16 %v196
      %v256 = vunpack.c.l.b16 %v197
      %v257 = vunpack.c.l.b16 %v198
      %v258 = vunpack.c.l.b16 %v199
      %v259 = vpack.c.b16 %v235, %v234
      %v260 = vpack.c.b16 %v237, %v236
      %v261 = vpack.c.b16 %v239, %v238
      %v262 = vpack.c.b16 %v241, %v240
      %v263 = vpack.c.b16 %v243, %v242
      %v264 = vpack.c.b16 %v245, %v244
      %v265 = vpack.c.b16 %v247, %v246
      %v266 = vpack.c.b16 %v249, %v248
      %v267 = vpack.c.b16 %v251, %v250
      %v268 = vpack.c.b16 %v253, %v252
      %v269 = vpack.c.b16 %v255, %v254
      %v270 = vpack.c.b16 %v257, %v256
      %v271 = vpack.c.b16 %v258, %v258
      %v277 = vunpack.c.l.b16 %v200
      %v278 = vunpack.c.l.b16 %v201
      %v279 = vunpack.c.l.b16 %v202
      %v280 = vunpack.c.l.b16 %v203
      %v281 = vunpack.c.l.b16 %v204
      %v282 = vpack.c.b16 %v278, %v277
      %v283 = vpack.c.b16 %v280, %v279
      %v284 = vpack.c.b16 %v281, %v281
      %vm287 = vcmask 293888
      %v289 = vsel %vm287, %v259, 0
      %v292 = vsel %vm287, %v260, 0
      %v295 = vsel %vm287, %v261, 0
      %v298 = vsel %vm287, %v262, 0
      %v301 = vsel %vm287, %v263, 0
      %v304 = vsel %vm287, %v264, 0
      %v307 = vsel %vm287, %v265, 0
      %v310 = vsel %vm287, %v266, 0
      %v313 = vsel %vm287, %v267, 0
      %v316 = vsel %vm287, %v268, 0
      %v319 = vsel %vm287, %v269, 0
      %v322 = vsel %vm287, %v270, 0
      %v325 = vsel %vm287, %v271, 0
      %vm327 = vcmask 1041408
      %v329 = vsel %vm327, %v284, 0
      %331 = vmatpush.bf16.msra.mxu0 0
      %332 = vmatpush.bf16.msra.mxu0 0
      %333 = vmatpush.bf16.msra.mxu0 0
      %334 = vmatpush.bf16.msra.mxu0 0
      %335 = vmatpush.bf16.msra.mxu0 0
      %336 = vmatpush.bf16.msra.mxu0 %v329
      %337 = vmatpush.bf16.msra.mxu0 %v283
      %338 = vmatpush.bf16.msra.mxu0 %v282
      %339 = vmatmul.bf16.gmra.mxu0 %v289
      %v340 = vpop.f32.mrf.mxu0
      %v341 = vadd.f32 %v207, %v340
      %v342 = vpop.f32.mrf.mxu0
      %v343 = vadd.f32 %v207, %v342
      %344 = vmatmul.bf16.gmra.mxu0 %v292
      %v345 = vpop.f32.mrf.mxu0
      %v346 = vadd.f32 %v207, %v345
      %v347 = vpop.f32.mrf.mxu0
      %v348 = vadd.f32 %v207, %v347
      %349 = vmatmul.bf16.gmra.mxu0 %v295
      %v350 = vpop.f32.mrf.mxu0
      %v351 = vadd.f32 %v207, %v350
      %v352 = vpop.f32.mrf.mxu0
      %v353 = vadd.f32 %v207, %v352
      %354 = vmatmul.bf16.gmra.mxu0 %v298
      %v355 = vpop.f32.mrf.mxu0
      %v356 = vadd.f32 %v207, %v355
      %v357 = vpop.f32.mrf.mxu0
      %v358 = vadd.f32 %v207, %v357
      %359 = vmatmul.bf16.gmra.mxu0 %v301
      %v360 = vpop.f32.mrf.mxu0
      %v361 = vadd.f32 %v207, %v360
      %v362 = vpop.f32.mrf.mxu0
      %v363 = vadd.f32 %v207, %v362
      %364 = vmatmul.bf16.gmra.mxu0 %v304
      %v365 = vpop.f32.mrf.mxu0
      %v366 = vadd.f32 %v207, %v365
      %v367 = vpop.f32.mrf.mxu0
      %v368 = vadd.f32 %v207, %v367
      %369 = vmatmul.bf16.gmra.mxu0 %v307
      %v370 = vpop.f32.mrf.mxu0
      %v371 = vadd.f32 %v207, %v370
      %v372 = vpop.f32.mrf.mxu0
      %v373 = vadd.f32 %v207, %v372
      %374 = vmatmul.bf16.gmra.mxu0 %v310
      %v375 = vpop.f32.mrf.mxu0
      %v376 = vadd.f32 %v207, %v375
      %v377 = vpop.f32.mrf.mxu0
      %v378 = vadd.f32 %v207, %v377
      %379 = vmatmul.bf16.gmra.mxu0 %v313
      %v380 = vpop.f32.mrf.mxu0
      %v381 = vadd.f32 %v207, %v380
      %v382 = vpop.f32.mrf.mxu0
      %v383 = vadd.f32 %v207, %v382
      %384 = vmatmul.bf16.gmra.mxu0 %v316
      %v385 = vpop.f32.mrf.mxu0
      %v386 = vadd.f32 %v207, %v385
      %v387 = vpop.f32.mrf.mxu0
      %v388 = vadd.f32 %v207, %v387
      %389 = vmatmul.bf16.gmra.mxu0 %v319
      %v390 = vpop.f32.mrf.mxu0
      %v391 = vadd.f32 %v207, %v390
      %v392 = vpop.f32.mrf.mxu0
      %v393 = vadd.f32 %v207, %v392
      %394 = vmatmul.bf16.gmra.mxu0 %v322
      %v395 = vpop.f32.mrf.mxu0
      %v396 = vadd.f32 %v207, %v395
      %v397 = vpop.f32.mrf.mxu0
      %v398 = vadd.f32 %v207, %v397
      %399 = vmatmul.bf16.gmra.mxu0 %v325
      %v400 = vpop.f32.mrf.mxu0
      %v401 = vadd.f32 %v207, %v400
      %v402 = vpop.f32.mrf.mxu0
      %403 = vdwg.mxu0
      %vm404 = vcmask 64512
      %405 = vst.msk [vmem:[%s172] sm:$0xff] %vm404, %v341
      %406 = vst.msk [vmem:[%s172 + $0x8] sm:$0xff] %vm404, %v343
      %407 = vst.msk [vmem:[%s172 + $0x10] sm:$0xff] %vm404, %v346
      %408 = vst.msk [vmem:[%s172 + $0x18] sm:$0xff] %vm404, %v348
      %409 = vst.msk [vmem:[%s172 + $0x20] sm:$0xff] %vm404, %v351
      %410 = vst.msk [vmem:[%s172 + $0x28] sm:$0xff] %vm404, %v353
      %411 = vst.msk [vmem:[%s172 + $0x30] sm:$0xff] %vm404, %v356
      %412 = vst.msk [vmem:[%s172 + $0x38] sm:$0xff] %vm404, %v358
      %413 = vst.msk [vmem:[%s172 + $0x40] sm:$0xff] %vm404, %v361
      %414 = vst.msk [vmem:[%s172 + $0x48] sm:$0xff] %vm404, %v363
      %415 = vst.msk [vmem:[%s172 + $0x50] sm:$0xff] %vm404, %v366
      %416 = vst.msk [vmem:[%s172 + $0x58] sm:$0xff] %vm404, %v368
      %417 = vst.msk [vmem:[%s172 + $0x60] sm:$0xff] %vm404, %v371
      %418 = vst.msk [vmem:[%s172 + $0x68] sm:$0xff] %vm404, %v373
      %419 = vst.msk [vmem:[%s172 + $0x70] sm:$0xff] %vm404, %v376
      %420 = vst.msk [vmem:[%s172 + $0x78] sm:$0xff] %vm404, %v378
      %421 = vst.msk [vmem:[%s172 + $0x80] sm:$0xff] %vm404, %v381
      %422 = vst.msk [vmem:[%s172 + $0x88] sm:$0xff] %vm404, %v383
      %423 = vst.msk [vmem:[%s172 + $0x90] sm:$0xff] %vm404, %v386
      %424 = vst.msk [vmem:[%s172 + $0x98] sm:$0xff] %vm404, %v388
      %425 = vst.msk [vmem:[%s172 + $0xa0] sm:$0xff] %vm404, %v391
      %426 = vst.msk [vmem:[%s172 + $0xa8] sm:$0xff] %vm404, %v393
      %427 = vst.msk [vmem:[%s172 + $0xb0] sm:$0xff] %vm404, %v396
      %428 = vst.msk [vmem:[%s172 + $0xb8] sm:$0xff] %vm404, %v398
      %429 = vst.msk [vmem:[%s172 + $0xc0] sm:$0xff] %vm404, %v401
      %s430 = smul.u32 25, %s14
      %p431 = scmp.lt.s32.totalorder %s430, 49
      %s432 = scalar_select %p431, %s430, 49
      %s433 = smul.addr %s432, 8
      %s434 = scalar_lea.vmem %s3, %s433
      // Predicated region
      $region33: #{conv2d_pallas.1} parent=31 // pred_check
        %p435 = pneg %p100
      $region34: #{conv2d_pallas.1} parent=31 // pred_check_branch
        %437 = sbr.rel (%p435) target = $region36
      $region35: #{conv2d_pallas.1} parent=31 // pred_region
        %s438 = smul.u32 25, %s14
      $region36: #{conv2d_pallas.1} parent=31 // pred_fallthru
        _
    $region32: #{conv2d_pallas.1} parent=5 // pred_fallthru
      _
    %p439 = scmp.le.s32.totalorder 2, %s9
    // Predicated region
    $region37: #{conv2d_pallas.1} parent=5 // pred_check
      %p440 = pneg %p439
    $region38: #{conv2d_pallas.1} parent=5 // pred_check_branch
      %442 = sbr.rel (%p440) target = $region40
    $region39: #{conv2d_pallas.1} parent=5 // pred_region
      %s443 = ssub.s32 %s9, 2
      // Predicated region
      $region41: #{conv2d_pallas.1} parent=39 // pred_check
        %p444 = pneg %p106
      $region42: #{conv2d_pallas.1} parent=39 // pred_check_branch
        %446 = sbr.rel (%p444) target = $region44
      $region43: #{conv2d_pallas.1} parent=39 // pred_region
        %s447 = smul.u32 25, %s15
        %p448 = scmp.lt.s32.totalorder %s447, 49
        %s449 = scalar_select %p448, %s447, 49
        %s450 = smul.addr %s449, 8
        %s451 = scalar_lea.vmem %s3, %s450
      $region44: #{conv2d_pallas.1} parent=39 // pred_fallthru
        _
    $region40: #{conv2d_pallas.1} parent=5 // pred_fallthru
      _
  $region6: #{conv2d_pallas.1} parent=0 // loop_footer
    %s13 = sadd.s32 1, %s9
  $region7: #{conv2d_pallas.1} parent=0 // loop_footer_branch
    %8 = sbr.rel target = $region3
  $region8: #{conv2d_pallas.1} parent=0 // loop_exit
    _

</llo_original>
